<compile_context>
chip_gen: v7x
topology: tpu7x:2x2x1
jax: 0.10.0
libtpu: 0.0.40
codegen_flags: <defaults>
</compile_context>

<pallas_src>
import jax
import jax.numpy as jnp
from jax.experimental import pallas as pl
from jax.experimental.pallas import tpu as pltpu

# AWQ packing order: nibble p of packed word c holds output column 8*c + AWQ_PACK_ORDER[p]
AWQ_PACK_ORDER = (0, 2, 4, 6, 1, 3, 5, 7)
_LANES = 128


def _round_up(v, m):
    return (v + m - 1) // m * m


def _vmem_capacity_bytes():
    try:
        return int(pltpu.get_tpu_info().vmem_capacity_bytes)
    except Exception:
        return 64 * 2**20  # conservative (v7x-sized) fallback


# ---------------------------------------------------------------------------
# One-time, load-time weight conversion (plain JAX; done once per checkpoint).
# ---------------------------------------------------------------------------
def awq_unpack(packed):
    """AWQ-packed int32 (R, N//8) -> int32 (R, N) of 4-bit values, natural column order."""
    R, C = packed.shape
    u = jax.lax.bitcast_convert_type(packed, jnp.uint32)
    nibbles = jnp.stack([(u >> (4 * p)) & jnp.uint32(0xF) for p in range(8)], axis=-1)
    inv = [0] * 8
    for p, col in enumerate(AWQ_PACK_ORDER):
        inv[col] = p
    natural = nibbles[:, :, jnp.asarray(inv)]   # natural[:, c, q] = column 8*c + q
    return natural.reshape(R, 8 * C).astype(jnp.int32)


def pack_along_k_grouped(intw, group_size):
    """4-bit ints (K, N) -> int32 (K//8, N), packed along K *within each group*.

    For group g (rows [g*G, (g+1)*G)): nibble p of packed word (g*G8 + kk, n) holds
    W[g*G + p*G8 + kk, n] with G8 = G//8.  This keeps output columns in natural lane
    order AND keeps each quantization group self-contained in G8 consecutive packed
    rows, so the in-kernel unpack+dequant is a single fused per-group pass.
    """
    K, N = intw.shape
    G = group_size
    assert G % 8 == 0 and K % G == 0
    G8, KG = G // 8, K // G
    u = intw.astype(jnp.uint32).reshape(KG, 8, G8, N)   # u[g, p, kk, n]
    out = jnp.zeros((KG, G8, N), jnp.uint32)
    for p in range(8):
        out = out | (u[:, p] << (4 * p))
    return jax.lax.bitcast_convert_type(out.reshape(K // 8, N), jnp.int32)


def convert_awq_weights(qweight, qzeros, scales, group_size):
    """Convert AWQ GEMM checkpoint buffers to the TPU-friendly layout (run at load time).

    Returns (qweight_k [K//8, Npad] int32, zeros [KG, Npad] int32, scales [KG, Npad] f32,
    out_features).  N is padded to a multiple of 128 lanes so all kernel stores are
    lane-dense.
    """
    w_int = awq_unpack(qweight)                 # (K, N) values 0..15
    z_int = awq_unpack(qzeros)                  # (KG, N)
    N = w_int.shape[1]
    n_pad = _round_up(N, _LANES)
    if n_pad != N:
        w_int = jnp.pad(w_int, ((0, 0), (0, n_pad - N)))
        z_int = jnp.pad(z_int, ((0, 0), (0, n_pad - N)))
        scales = jnp.pad(scales.astype(jnp.float32), ((0, 0), (0, n_pad - N)))
    qweight_k = pack_along_k_grouped(w_int, group_size)
    return qweight_k, z_int.astype(jnp.int32), scales.astype(jnp.float32), N


# ---------------------------------------------------------------------------
# Pallas kernel
# ---------------------------------------------------------------------------
def _make_kernel(K, KG, G, has_bias):
    G8 = G // 8

    def kernel(*refs):
        if has_bias:
            x_ref, qw_ref, z_ref, s_ref, b_ref, o_ref, w_bf = refs
        else:
            x_ref, qw_ref, z_ref, s_ref, o_ref, w_bf = refs
            b_ref = None

        # ---- weight-stationary dequant: only on the first M tile of each N tile ----
        @pl.when(pl.program_id(1) == 0)
        def _dequant():
            # Fused per-group pass: shift/mask -> int subtract of the zero-point ->
            # single int->f32 convert -> f32 scale mul -> bf16 store directly into
            # the stationary scratch.  One store per element, no f32 transient slab.
            for g in range(KG):
                qw_g = qw_ref[g * G8:(g + 1) * G8, :]          # (G8, bn) int32
                z_g = z_ref[g:g + 1, :]                        # (1, bn)  int32
                s_g = s_ref[g:g + 1, :]                        # (1, bn)  f32
                base = g * G
                for p in range(8):
                    nib = (qw_g >> (4 * p)) & 0xF              # int32, 0..15
                    w_bf[base + p * G8: base + (p + 1) * G8, :] = (
                        (nib - z_g).astype(jnp.float32) * s_g
                    ).astype(jnp.bfloat16)

        # ---- hot path: bf16 x bf16 MXU matmul, f32 accumulation, cast on store ----
        acc = jnp.dot(x_ref[...], w_bf[...], preferred_element_type=jnp.float32)
        if has_bias:
            acc = acc + b_ref[...]
        o_ref[...] = acc.astype(o_ref.dtype)

    return kernel


def _vmem_bytes(block_m, block_n, K, KG, out_bytes, has_bias):
    x_t = block_m * K * 2                 # bf16 activation tile
    qw_t = (K // 8) * block_n * 4         # packed int32 weight tile
    z_t = KG * block_n * 4                # int32 zeros tile
    s_t = KG * block_n * 4                # f32 scales tile
    b_t = block_n * 4 if has_bias else 0
    o_t = block_m * block_n * out_bytes   # output tile in x.dtype
    w_s = K * block_n * 2                 # stationary dequantized bf16 weight (scratch)
    slack = 2 << 20                       # per-group dequant vreg temporaries, misc
    return 2 * (x_t + qw_t + z_t + s_t + b_t + o_t) + w_s + slack


def wq_linear(x, qweight_k, zeros, scales, bias, group_size, out_features=None,
              *, block_m_max=256, block_n=None):
    """Pallas TPU forward for AWQ 4-bit WQLinear.

    x            : [..., K] activations (cast to bf16 for the MXU; output in x.dtype)
    qweight_k    : int32 [K//8, Npad]   (group-K-packed; see convert_awq_weights)
    zeros        : int32 [K//group_size, Npad]
    scales       : f32   [K//group_size, Npad]
    bias         : [out_features] or None
    out_features : true N before lane padding (defaults to Npad)
    """
    *lead, K = x.shape
    Np = qweight_k.shape[1]
    G = group_size
    assert K % 8 == 0 and K % G == 0 and G % 8 == 0
    KG = K // G
    assert qweight_k.shape == (K // 8, Np)
    assert zeros.shape == (KG, Np) and scales.shape == (KG, Np)
    assert Np % _LANES == 0, "pad weights to a multiple of 128 lanes (convert_awq_weights)"
    if out_features is None:
        out_features = Np

    out_dtype = x.dtype
    out_bytes = jnp.dtype(out_dtype).itemsize
    has_bias = bias is not None

    x2d = x.reshape(-1, K).astype(jnp.bfloat16)
    M = x2d.shape[0]

    hw_vmem = _vmem_capacity_bytes()
    budget = max(hw_vmem - 8 * 2**20, 24 * 2**20)   # leave headroom; v7x has 64 MiB/TC

    # ---- N tile: lane aligned, prefer >=2 tiles (megacore), 512 only on 128MiB parts ----
    if block_n is None:
        prefer = (512, 256, 128) if hw_vmem >= 100 * 2**20 else (256, 128)
        block_n = next((c for c in prefer if Np % c == 0 and Np // c >= 2), None)
        if block_n is None:
            block_n = next((c for c in (256, 128) if Np % c == 0), Np)

    # ---- M tile: large but with limited padding waste (multiple of 16 for bf16 x) ----
    block_m = min(block_m_max, _round_up(M, 16))
    while (block_m > 32 and (block_m // 2) % 16 == 0
           and (_round_up(M, block_m) - M) * 8 > M):
        block_m //= 2

    # ---- make sure the tiles fit the per-generation VMEM budget ----
    while _vmem_bytes(block_m, block_n, K, KG, out_bytes, has_bias) > budget:
        if block_m > 64:
            block_m = max(32, _round_up(block_m // 2, 16))
        elif block_n > 128 and Np % (block_n // 2) == 0:
            block_n //= 2
        else:
            break

    m_pad = _round_up(M, block_m)
    if m_pad != M:
        x2d = jnp.pad(x2d, ((0, m_pad - M), (0, 0)))

    num_n = Np // block_n
    num_m = m_pad // block_m

    inputs = [x2d, qweight_k, zeros, scales]
    in_specs = [
        pl.BlockSpec((block_m, K), lambda j, i: (i, 0)),        # x tile (full K)
        pl.BlockSpec((K // 8, block_n), lambda j, i: (0, j)),   # packed weights (N tile)
        pl.BlockSpec((KG, block_n), lambda j, i: (0, j)),       # zeros (int32)
        pl.BlockSpec((KG, block_n), lambda j, i: (0, j)),       # scales (f32)
    ]
    if has_bias:
        b2d = bias.astype(jnp.float32).reshape(1, -1)
        if b2d.shape[1] != Np:
            b2d = jnp.pad(b2d, ((0, 0), (0, Np - b2d.shape[1])))
        inputs.append(b2d)
        in_specs.append(pl.BlockSpec((1, block_n), lambda j, i: (0, j)))

    est = _vmem_bytes(block_m, block_n, K, KG, out_bytes, has_bias)
    vmem_limit = int(min(budget, max(32 * 2**20, int(1.25 * est))))

    out = pl.pallas_call(
        _make_kernel(K, KG, G, has_bias),
        out_shape=jax.ShapeDtypeStruct((m_pad, Np), out_dtype),
        grid=(num_n, num_m),
        in_specs=in_specs,
        out_specs=pl.BlockSpec((block_m, block_n), lambda j, i: (i, j)),
        scratch_shapes=[pltpu.VMEM((K, block_n), jnp.bfloat16)],  # stationary dequant weight
        compiler_params=pltpu.CompilerParams(
            # N parallel (maps onto both v7x TensorCores), M sequential so i==0 runs
            # first within each N tile (required for the weight-stationary scratch).
            dimension_semantics=("parallel", "arbitrary"),
            vmem_limit_bytes=vmem_limit),
    )(*inputs)

    out = out[:M, :out_features]
    return out.reshape(tuple(lead) + (out_features,))


# ---------------------------------------------------------------------------
# Test glue: build checkpoint-format AWQ buffers from ground-truth int weights.
# ---------------------------------------------------------------------------
def awq_pack(intmat):
    """Pack int values (0..15), shape (R, N) -> int32 (R, N//8) using the AWQ order."""
    R, Ncols = intmat.shape
    C = Ncols // 8
    blocks = intmat.reshape(R, C, 8).astype(jnp.uint32)
    packed = jnp.zeros((R, C), dtype=jnp.uint32)
    for p, col in enumerate(AWQ_PACK_ORDER):
        packed = packed | (blocks[:, :, col] << (4 * p))
    return jax.lax.bitcast_convert_type(packed, jnp.int32)


if __name__ == "__main__":
    key = jax.random.PRNGKey(0)
    k1, k2, k3, k4, k5 = jax.random.split(key, 5)

    # Small module-consistent shapes: batch=2, seq=8, in=64, out=64, group_size=32.
    B, S, K, N, G = 2, 8, 64, 64, 32
    KG = K // G

    intweight = jax.random.randint(k1, (K, N), 0, 16, dtype=jnp.int32)   # true 4-bit weights
    intzeros = jax.random.randint(k2, (KG, N), 0, 16, dtype=jnp.int32)   # true 4-bit zeros
    scales = jax.random.uniform(k3, (KG, N), jnp.float32) * 0.02 + 0.005
    bias = jax.random.normal(k4, (N,), jnp.float32) * 0.1
    x = jax.random.normal(k5, (B, S, K), jnp.float32)
    # Round x onto the bf16 grid (the kernel's MXU operand precision; the CUDA
    # reference kernel is fp16 end-to-end, so this is the TPU stand-in).
    x = x.astype(jnp.bfloat16).astype(jnp.float32)

    # Checkpoint-format AWQ buffers, then one-time conversion to the TPU layout.
    qweight = awq_pack(intweight)    # (K, N//8) int32, AWQ nibble order
    qzeros = awq_pack(intzeros)      # (KG, N//8) int32
    qweight_k, zeros_i, scales_f, out_features = convert_awq_weights(
        qweight, qzeros, scales, G)

    out = wq_linear(x, qweight_k, zeros_i, scales_f, bias, G, out_features)
    out = jax.block_until_ready(out)
    assert out.shape == (B, S, N)

    # Plain-JAX reference: dequantize with the ground-truth ints (exact int subtract,
    # f32 scale mul, bf16 weight as used on the MXU), accumulate in f32.
    w_deq = ((intweight.astype(jnp.float32)
              - jnp.repeat(intzeros.astype(jnp.float32), G, axis=0))
             * jnp.repeat(scales, G, axis=0)).astype(jnp.bfloat16).astype(jnp.float32)
    ref = jnp.einsum("bsk,kn->bsn", x, w_deq) + bias

    max_err = float(jnp.max(jnp.abs(out - ref)))
    if not bool(jnp.allclose(out.astype(jnp.float32), ref, rtol=2e-2, atol=2e-2)):
        raise AssertionError(f"Pallas WQLinear mismatch, max abs err = {max_err}")
    print("KERNEL_OK")
</pallas_src>

<mosaic_0001>
module attributes {stable_mosaic.version = 11 : i64} {
  func.func @kernel(%arg0: i32, %arg1: i32, %arg2: memref<16x64xbf16, #tpu.memory_space<vmem>>, %arg3: memref<8x128xi32, #tpu.memory_space<vmem>>, %arg4: memref<2x128xi32, #tpu.memory_space<vmem>>, %arg5: memref<2x128xf32, #tpu.memory_space<vmem>>, %arg6: memref<1x128xf32, #tpu.memory_space<vmem>>, %arg7: memref<16x128xf32, #tpu.memory_space<vmem>>, %arg8: memref<64x128xbf16, #tpu.memory_space<vmem>>) attributes {dimension_semantics = [#tpu.dimension_semantics<parallel>, #tpu.dimension_semantics<arbitrary>], iteration_bounds = array<i64: 1, 1>, scalar_prefetch = 0 : i64, scratch_operands = 1 : i64, tpu.core_type = #tpu.core_type<tc>, window_params = [{transform_indices = @transform_0, window_bounds = array<i64: 16, 64>}, {transform_indices = @transform_1, window_bounds = array<i64: 8, 128>}, {transform_indices = @transform_2, window_bounds = array<i64: 2, 128>}, {transform_indices = @transform_3, window_bounds = array<i64: 2, 128>}, {transform_indices = @transform_4, window_bounds = array<i64: 1, 128>}, {transform_indices = @transform_5, window_bounds = array<i64: 16, 128>}]} {
    %c0_i32 = arith.constant 0 : i32
    %0 = arith.cmpi eq, %arg1, %c0_i32 : i32
    %1 = arith.extui %0 : i1 to i32
    %c0_i32_0 = arith.constant 0 : i32
    %2 = arith.cmpi ne, %1, %c0_i32_0 : i32
    scf.if %2 {
      %c0_8 = arith.constant 0 : index
      %c0_9 = arith.constant 0 : index
      %10 = vector.load %arg3[%c0_8, %c0_9] : memref<8x128xi32, #tpu.memory_space<vmem>>, vector<4x128xi32>
      %c0_10 = arith.constant 0 : index
      %c0_11 = arith.constant 0 : index
      %11 = vector.load %arg4[%c0_10, %c0_11] : memref<2x128xi32, #tpu.memory_space<vmem>>, vector<1x128xi32>
      %c0_12 = arith.constant 0 : index
      %c0_13 = arith.constant 0 : index
      %12 = vector.load %arg5[%c0_12, %c0_13] : memref<2x128xf32, #tpu.memory_space<vmem>>, vector<1x128xf32>
      %c0_i32_14 = arith.constant 0 : i32
      %13 = vector.broadcast %c0_i32_14 : i32 to vector<4x128xi32>
      %14 = arith.shrsi %10, %13 : vector<4x128xi32>
      %c15_i32 = arith.constant 15 : i32
      %15 = vector.broadcast %c15_i32 : i32 to vector<4x128xi32>
      %16 = arith.andi %14, %15 : vector<4x128xi32>
      %17 = vector.broadcast %11 : vector<1x128xi32> to vector<4x128xi32>
      %18 = arith.subi %16, %17 : vector<4x128xi32>
      %19 = arith.sitofp %18 : vector<4x128xi32> to vector<4x128xf32>
      %20 = vector.broadcast %12 : vector<1x128xf32> to vector<4x128xf32>
      %21 = arith.mulf %19, %20 : vector<4x128xf32>
      %22 = arith.truncf %21 : vector<4x128xf32> to vector<4x128xbf16>
      %c0_15 = arith.constant 0 : index
      %c0_16 = arith.constant 0 : index
      %23 = vector.load %arg8[%c0_15, %c0_16] : memref<64x128xbf16, #tpu.memory_space<vmem>>, vector<4x128xbf16>
      tpu.vector_store %arg8[%c0_15, %c0_16], %22 {strides = array<i32>} : memref<64x128xbf16, #tpu.memory_space<vmem>>, vector<4x128xbf16>,
      %c4_i32 = arith.constant 4 : i32
      %24 = vector.broadcast %c4_i32 : i32 to vector<4x128xi32>
      %25 = arith.shrsi %10, %24 : vector<4x128xi32>
      %c15_i32_17 = arith.constant 15 : i32
      %26 = vector.broadcast %c15_i32_17 : i32 to vector<4x128xi32>
      %27 = arith.andi %25, %26 : vector<4x128xi32>
      %28 = vector.broadcast %11 : vector<1x128xi32> to vector<4x128xi32>
      %29 = arith.subi %27, %28 : vector<4x128xi32>
      %30 = arith.sitofp %29 : vector<4x128xi32> to vector<4x128xf32>
      %31 = vector.broadcast %12 : vector<1x128xf32> to vector<4x128xf32>
      %32 = arith.mulf %30, %31 : vector<4x128xf32>
      %33 = arith.truncf %32 : vector<4x128xf32> to vector<4x128xbf16>
      %c4 = arith.constant 4 : index
      %c0_18 = arith.constant 0 : index
      %34 = vector.load %arg8[%c4, %c0_18] : memref<64x128xbf16, #tpu.memory_space<vmem>>, vector<4x128xbf16>
      tpu.vector_store %arg8[%c4, %c0_18], %33 {strides = array<i32>} : memref<64x128xbf16, #tpu.memory_space<vmem>>, vector<4x128xbf16>,
      %c8_i32 = arith.constant 8 : i32
      %35 = vector.broadcast %c8_i32 : i32 to vector<4x128xi32>
      %36 = arith.shrsi %10, %35 : vector<4x128xi32>
      %c15_i32_19 = arith.constant 15 : i32
      %37 = vector.broadcast %c15_i32_19 : i32 to vector<4x128xi32>
      %38 = arith.andi %36, %37 : vector<4x128xi32>
      %39 = vector.broadcast %11 : vector<1x128xi32> to vector<4x128xi32>
      %40 = arith.subi %38, %39 : vector<4x128xi32>
      %41 = arith.sitofp %40 : vector<4x128xi32> to vector<4x128xf32>
      %42 = vector.broadcast %12 : vector<1x128xf32> to vector<4x128xf32>
      %43 = arith.mulf %41, %42 : vector<4x128xf32>
      %44 = arith.truncf %43 : vector<4x128xf32> to vector<4x128xbf16>
      %c8 = arith.constant 8 : index
      %c0_20 = arith.constant 0 : index
      %45 = vector.load %arg8[%c8, %c0_20] : memref<64x128xbf16, #tpu.memory_space<vmem>>, vector<4x128xbf16>
      tpu.vector_store %arg8[%c8, %c0_20], %44 {strides = array<i32>} : memref<64x128xbf16, #tpu.memory_space<vmem>>, vector<4x128xbf16>,
      %c12_i32 = arith.constant 12 : i32
      %46 = vector.broadcast %c12_i32 : i32 to vector<4x128xi32>
      %47 = arith.shrsi %10, %46 : vector<4x128xi32>
      %c15_i32_21 = arith.constant 15 : i32
      %48 = vector.broadcast %c15_i32_21 : i32 to vector<4x128xi32>
      %49 = arith.andi %47, %48 : vector<4x128xi32>
      %50 = vector.broadcast %11 : vector<1x128xi32> to vector<4x128xi32>
      %51 = arith.subi %49, %50 : vector<4x128xi32>
      %52 = arith.sitofp %51 : vector<4x128xi32> to vector<4x128xf32>
      %53 = vector.broadcast %12 : vector<1x128xf32> to vector<4x128xf32>
      %54 = arith.mulf %52, %53 : vector<4x128xf32>
      %55 = arith.truncf %54 : vector<4x128xf32> to vector<4x128xbf16>
      %c12 = arith.constant 12 : index
      %c0_22 = arith.constant 0 : index
      %56 = vector.load %arg8[%c12, %c0_22] : memref<64x128xbf16, #tpu.memory_space<vmem>>, vector<4x128xbf16>
      tpu.vector_store %arg8[%c12, %c0_22], %55 {strides = array<i32>} : memref<64x128xbf16, #tpu.memory_space<vmem>>, vector<4x128xbf16>,
      %c16_i32 = arith.constant 16 : i32
      %57 = vector.broadcast %c16_i32 : i32 to vector<4x128xi32>
      %58 = arith.shrsi %10, %57 : vector<4x128xi32>
      %c15_i32_23 = arith.constant 15 : i32
      %59 = vector.broadcast %c15_i32_23 : i32 to vector<4x128xi32>
      %60 = arith.andi %58, %59 : vector<4x128xi32>
      %61 = vector.broadcast %11 : vector<1x128xi32> to vector<4x128xi32>
      %62 = arith.subi %60, %61 : vector<4x128xi32>
      %63 = arith.sitofp %62 : vector<4x128xi32> to vector<4x128xf32>
      %64 = vector.broadcast %12 : vector<1x128xf32> to vector<4x128xf32>
      %65 = arith.mulf %63, %64 : vector<4x128xf32>
      %66 = arith.truncf %65 : vector<4x128xf32> to vector<4x128xbf16>
      %c16 = arith.constant 16 : index
      %c0_24 = arith.constant 0 : index
      %67 = vector.load %arg8[%c16, %c0_24] : memref<64x128xbf16, #tpu.memory_space<vmem>>, vector<4x128xbf16>
      tpu.vector_store %arg8[%c16, %c0_24], %66 {strides = array<i32>} : memref<64x128xbf16, #tpu.memory_space<vmem>>, vector<4x128xbf16>,
      %c20_i32 = arith.constant 20 : i32
      %68 = vector.broadcast %c20_i32 : i32 to vector<4x128xi32>
      %69 = arith.shrsi %10, %68 : vector<4x128xi32>
      %c15_i32_25 = arith.constant 15 : i32
      %70 = vector.broadcast %c15_i32_25 : i32 to vector<4x128xi32>
      %71 = arith.andi %69, %70 : vector<4x128xi32>
      %72 = vector.broadcast %11 : vector<1x128xi32> to vector<4x128xi32>
      %73 = arith.subi %71, %72 : vector<4x128xi32>
      %74 = arith.sitofp %73 : vector<4x128xi32> to vector<4x128xf32>
      %75 = vector.broadcast %12 : vector<1x128xf32> to vector<4x128xf32>
      %76 = arith.mulf %74, %75 : vector<4x128xf32>
      %77 = arith.truncf %76 : vector<4x128xf32> to vector<4x128xbf16>
      %c20 = arith.constant 20 : index
      %c0_26 = arith.constant 0 : index
      %78 = vector.load %arg8[%c20, %c0_26] : memref<64x128xbf16, #tpu.memory_space<vmem>>, vector<4x128xbf16>
      tpu.vector_store %arg8[%c20, %c0_26], %77 {strides = array<i32>} : memref<64x128xbf16, #tpu.memory_space<vmem>>, vector<4x128xbf16>,
      %c24_i32 = arith.constant 24 : i32
      %79 = vector.broadcast %c24_i32 : i32 to vector<4x128xi32>
      %80 = arith.shrsi %10, %79 : vector<4x128xi32>
      %c15_i32_27 = arith.constant 15 : i32
      %81 = vector.broadcast %c15_i32_27 : i32 to vector<4x128xi32>
      %82 = arith.andi %80, %81 : vector<4x128xi32>
      %83 = vector.broadcast %11 : vector<1x128xi32> to vector<4x128xi32>
      %84 = arith.subi %82, %83 : vector<4x128xi32>
      %85 = arith.sitofp %84 : vector<4x128xi32> to vector<4x128xf32>
      %86 = vector.broadcast %12 : vector<1x128xf32> to vector<4x128xf32>
      %87 = arith.mulf %85, %86 : vector<4x128xf32>
      %88 = arith.truncf %87 : vector<4x128xf32> to vector<4x128xbf16>
      %c24 = arith.constant 24 : index
      %c0_28 = arith.constant 0 : index
      %89 = vector.load %arg8[%c24, %c0_28] : memref<64x128xbf16, #tpu.memory_space<vmem>>, vector<4x128xbf16>
      tpu.vector_store %arg8[%c24, %c0_28], %88 {strides = array<i32>} : memref<64x128xbf16, #tpu.memory_space<vmem>>, vector<4x128xbf16>,
      %c28_i32 = arith.constant 28 : i32
      %90 = vector.broadcast %c28_i32 : i32 to vector<4x128xi32>
      %91 = arith.shrsi %10, %90 : vector<4x128xi32>
      %c15_i32_29 = arith.constant 15 : i32
      %92 = vector.broadcast %c15_i32_29 : i32 to vector<4x128xi32>
      %93 = arith.andi %91, %92 : vector<4x128xi32>
      %94 = vector.broadcast %11 : vector<1x128xi32> to vector<4x128xi32>
      %95 = arith.subi %93, %94 : vector<4x128xi32>
      %96 = arith.sitofp %95 : vector<4x128xi32> to vector<4x128xf32>
      %97 = vector.broadcast %12 : vector<1x128xf32> to vector<4x128xf32>
      %98 = arith.mulf %96, %97 : vector<4x128xf32>
      %99 = arith.truncf %98 : vector<4x128xf32> to vector<4x128xbf16>
      %c28 = arith.constant 28 : index
      %c0_30 = arith.constant 0 : index
      %100 = vector.load %arg8[%c28, %c0_30] : memref<64x128xbf16, #tpu.memory_space<vmem>>, vector<4x128xbf16>
      tpu.vector_store %arg8[%c28, %c0_30], %99 {strides = array<i32>} : memref<64x128xbf16, #tpu.memory_space<vmem>>, vector<4x128xbf16>,
      %c4_31 = arith.constant 4 : index
      %c0_32 = arith.constant 0 : index
      %101 = vector.load %arg3[%c4_31, %c0_32] : memref<8x128xi32, #tpu.memory_space<vmem>>, vector<4x128xi32>
      %c1 = arith.constant 1 : index
      %c0_33 = arith.constant 0 : index
      %102 = vector.load %arg4[%c1, %c0_33] : memref<2x128xi32, #tpu.memory_space<vmem>>, vector<1x128xi32>
      %c1_34 = arith.constant 1 : index
      %c0_35 = arith.constant 0 : index
      %103 = vector.load %arg5[%c1_34, %c0_35] : memref<2x128xf32, #tpu.memory_space<vmem>>, vector<1x128xf32>
      %c0_i32_36 = arith.constant 0 : i32
      %104 = vector.broadcast %c0_i32_36 : i32 to vector<4x128xi32>
      %105 = arith.shrsi %101, %104 : vector<4x128xi32>
      %c15_i32_37 = arith.constant 15 : i32
      %106 = vector.broadcast %c15_i32_37 : i32 to vector<4x128xi32>
      %107 = arith.andi %105, %106 : vector<4x128xi32>
      %108 = vector.broadcast %102 : vector<1x128xi32> to vector<4x128xi32>
      %109 = arith.subi %107, %108 : vector<4x128xi32>
      %110 = arith.sitofp %109 : vector<4x128xi32> to vector<4x128xf32>
      %111 = vector.broadcast %103 : vector<1x128xf32> to vector<4x128xf32>
      %112 = arith.mulf %110, %111 : vector<4x128xf32>
      %113 = arith.truncf %112 : vector<4x128xf32> to vector<4x128xbf16>
      %c32 = arith.constant 32 : index
      %c0_38 = arith.constant 0 : index
      %114 = vector.load %arg8[%c32, %c0_38] : memref<64x128xbf16, #tpu.memory_space<vmem>>, vector<4x128xbf16>
      tpu.vector_store %arg8[%c32, %c0_38], %113 {strides = array<i32>} : memref<64x128xbf16, #tpu.memory_space<vmem>>, vector<4x128xbf16>,
      %c4_i32_39 = arith.constant 4 : i32
      %115 = vector.broadcast %c4_i32_39 : i32 to vector<4x128xi32>
      %116 = arith.shrsi %101, %115 : vector<4x128xi32>
      %c15_i32_40 = arith.constant 15 : i32
      %117 = vector.broadcast %c15_i32_40 : i32 to vector<4x128xi32>
      %118 = arith.andi %116, %117 : vector<4x128xi32>
      %119 = vector.broadcast %102 : vector<1x128xi32> to vector<4x128xi32>
      %120 = arith.subi %118, %119 : vector<4x128xi32>
      %121 = arith.sitofp %120 : vector<4x128xi32> to vector<4x128xf32>
      %122 = vector.broadcast %103 : vector<1x128xf32> to vector<4x128xf32>
      %123 = arith.mulf %121, %122 : vector<4x128xf32>
      %124 = arith.truncf %123 : vector<4x128xf32> to vector<4x128xbf16>
      %c36 = arith.constant 36 : index
      %c0_41 = arith.constant 0 : index
      %125 = vector.load %arg8[%c36, %c0_41] : memref<64x128xbf16, #tpu.memory_space<vmem>>, vector<4x128xbf16>
      tpu.vector_store %arg8[%c36, %c0_41], %124 {strides = array<i32>} : memref<64x128xbf16, #tpu.memory_space<vmem>>, vector<4x128xbf16>,
      %c8_i32_42 = arith.constant 8 : i32
      %126 = vector.broadcast %c8_i32_42 : i32 to vector<4x128xi32>
      %127 = arith.shrsi %101, %126 : vector<4x128xi32>
      %c15_i32_43 = arith.constant 15 : i32
      %128 = vector.broadcast %c15_i32_43 : i32 to vector<4x128xi32>
      %129 = arith.andi %127, %128 : vector<4x128xi32>
      %130 = vector.broadcast %102 : vector<1x128xi32> to vector<4x128xi32>
      %131 = arith.subi %129, %130 : vector<4x128xi32>
      %132 = arith.sitofp %131 : vector<4x128xi32> to vector<4x128xf32>
      %133 = vector.broadcast %103 : vector<1x128xf32> to vector<4x128xf32>
      %134 = arith.mulf %132, %133 : vector<4x128xf32>
      %135 = arith.truncf %134 : vector<4x128xf32> to vector<4x128xbf16>
      %c40 = arith.constant 40 : index
      %c0_44 = arith.constant 0 : index
      %136 = vector.load %arg8[%c40, %c0_44] : memref<64x128xbf16, #tpu.memory_space<vmem>>, vector<4x128xbf16>
      tpu.vector_store %arg8[%c40, %c0_44], %135 {strides = array<i32>} : memref<64x128xbf16, #tpu.memory_space<vmem>>, vector<4x128xbf16>,
      %c12_i32_45 = arith.constant 12 : i32
      %137 = vector.broadcast %c12_i32_45 : i32 to vector<4x128xi32>
      %138 = arith.shrsi %101, %137 : vector<4x128xi32>
      %c15_i32_46 = arith.constant 15 : i32
      %139 = vector.broadcast %c15_i32_46 : i32 to vector<4x128xi32>
      %140 = arith.andi %138, %139 : vector<4x128xi32>
      %141 = vector.broadcast %102 : vector<1x128xi32> to vector<4x128xi32>
      %142 = arith.subi %140, %141 : vector<4x128xi32>
      %143 = arith.sitofp %142 : vector<4x128xi32> to vector<4x128xf32>
      %144 = vector.broadcast %103 : vector<1x128xf32> to vector<4x128xf32>
      %145 = arith.mulf %143, %144 : vector<4x128xf32>
      %146 = arith.truncf %145 : vector<4x128xf32> to vector<4x128xbf16>
      %c44 = arith.constant 44 : index
      %c0_47 = arith.constant 0 : index
      %147 = vector.load %arg8[%c44, %c0_47] : memref<64x128xbf16, #tpu.memory_space<vmem>>, vector<4x128xbf16>
      tpu.vector_store %arg8[%c44, %c0_47], %146 {strides = array<i32>} : memref<64x128xbf16, #tpu.memory_space<vmem>>, vector<4x128xbf16>,
      %c16_i32_48 = arith.constant 16 : i32
      %148 = vector.broadcast %c16_i32_48 : i32 to vector<4x128xi32>
      %149 = arith.shrsi %101, %148 : vector<4x128xi32>
      %c15_i32_49 = arith.constant 15 : i32
      %150 = vector.broadcast %c15_i32_49 : i32 to vector<4x128xi32>
      %151 = arith.andi %149, %150 : vector<4x128xi32>
      %152 = vector.broadcast %102 : vector<1x128xi32> to vector<4x128xi32>
      %153 = arith.subi %151, %152 : vector<4x128xi32>
      %154 = arith.sitofp %153 : vector<4x128xi32> to vector<4x128xf32>
      %155 = vector.broadcast %103 : vector<1x128xf32> to vector<4x128xf32>
      %156 = arith.mulf %154, %155 : vector<4x128xf32>
      %157 = arith.truncf %156 : vector<4x128xf32> to vector<4x128xbf16>
      %c48 = arith.constant 48 : index
      %c0_50 = arith.constant 0 : index
      %158 = vector.load %arg8[%c48, %c0_50] : memref<64x128xbf16, #tpu.memory_space<vmem>>, vector<4x128xbf16>
      tpu.vector_store %arg8[%c48, %c0_50], %157 {strides = array<i32>} : memref<64x128xbf16, #tpu.memory_space<vmem>>, vector<4x128xbf16>,
      %c20_i32_51 = arith.constant 20 : i32
      %159 = vector.broadcast %c20_i32_51 : i32 to vector<4x128xi32>
      %160 = arith.shrsi %101, %159 : vector<4x128xi32>
      %c15_i32_52 = arith.constant 15 : i32
      %161 = vector.broadcast %c15_i32_52 : i32 to vector<4x128xi32>
      %162 = arith.andi %160, %161 : vector<4x128xi32>
      %163 = vector.broadcast %102 : vector<1x128xi32> to vector<4x128xi32>
      %164 = arith.subi %162, %163 : vector<4x128xi32>
      %165 = arith.sitofp %164 : vector<4x128xi32> to vector<4x128xf32>
      %166 = vector.broadcast %103 : vector<1x128xf32> to vector<4x128xf32>
      %167 = arith.mulf %165, %166 : vector<4x128xf32>
      %168 = arith.truncf %167 : vector<4x128xf32> to vector<4x128xbf16>
      %c52 = arith.constant 52 : index
      %c0_53 = arith.constant 0 : index
      %169 = vector.load %arg8[%c52, %c0_53] : memref<64x128xbf16, #tpu.memory_space<vmem>>, vector<4x128xbf16>
      tpu.vector_store %arg8[%c52, %c0_53], %168 {strides = array<i32>} : memref<64x128xbf16, #tpu.memory_space<vmem>>, vector<4x128xbf16>,
      %c24_i32_54 = arith.constant 24 : i32
      %170 = vector.broadcast %c24_i32_54 : i32 to vector<4x128xi32>
      %171 = arith.shrsi %101, %170 : vector<4x128xi32>
      %c15_i32_55 = arith.constant 15 : i32
      %172 = vector.broadcast %c15_i32_55 : i32 to vector<4x128xi32>
      %173 = arith.andi %171, %172 : vector<4x128xi32>
      %174 = vector.broadcast %102 : vector<1x128xi32> to vector<4x128xi32>
      %175 = arith.subi %173, %174 : vector<4x128xi32>
      %176 = arith.sitofp %175 : vector<4x128xi32> to vector<4x128xf32>
      %177 = vector.broadcast %103 : vector<1x128xf32> to vector<4x128xf32>
      %178 = arith.mulf %176, %177 : vector<4x128xf32>
      %179 = arith.truncf %178 : vector<4x128xf32> to vector<4x128xbf16>
      %c56 = arith.constant 56 : index
      %c0_56 = arith.constant 0 : index
      %180 = vector.load %arg8[%c56, %c0_56] : memref<64x128xbf16, #tpu.memory_space<vmem>>, vector<4x128xbf16>
      tpu.vector_store %arg8[%c56, %c0_56], %179 {strides = array<i32>} : memref<64x128xbf16, #tpu.memory_space<vmem>>, vector<4x128xbf16>,
      %c28_i32_57 = arith.constant 28 : i32
      %181 = vector.broadcast %c28_i32_57 : i32 to vector<4x128xi32>
      %182 = arith.shrsi %101, %181 : vector<4x128xi32>
      %c15_i32_58 = arith.constant 15 : i32
      %183 = vector.broadcast %c15_i32_58 : i32 to vector<4x128xi32>
      %184 = arith.andi %182, %183 : vector<4x128xi32>
      %185 = vector.broadcast %102 : vector<1x128xi32> to vector<4x128xi32>
      %186 = arith.subi %184, %185 : vector<4x128xi32>
      %187 = arith.sitofp %186 : vector<4x128xi32> to vector<4x128xf32>
      %188 = vector.broadcast %103 : vector<1x128xf32> to vector<4x128xf32>
      %189 = arith.mulf %187, %188 : vector<4x128xf32>
      %190 = arith.truncf %189 : vector<4x128xf32> to vector<4x128xbf16>
      %c60 = arith.constant 60 : index
      %c0_59 = arith.constant 0 : index
      %191 = vector.load %arg8[%c60, %c0_59] : memref<64x128xbf16, #tpu.memory_space<vmem>>, vector<4x128xbf16>
      tpu.vector_store %arg8[%c60, %c0_59], %190 {strides = array<i32>} : memref<64x128xbf16, #tpu.memory_space<vmem>>, vector<4x128xbf16>,
    } else {
    }
    %c0 = arith.constant 0 : index
    %c0_1 = arith.constant 0 : index
    %3 = vector.load %arg2[%c0, %c0_1] : memref<16x64xbf16, #tpu.memory_space<vmem>>, vector<16x64xbf16>
    %c0_2 = arith.constant 0 : index
    %c0_3 = arith.constant 0 : index
    %4 = vector.load %arg8[%c0_2, %c0_3] : memref<64x128xbf16, #tpu.memory_space<vmem>>, vector<64x128xbf16>
    %cst = arith.constant dense<0.000000e+00> : vector<16x128xf32>
    %5 = tpu.matmul %3, %4, %cst {dimension_numbers = #tpu.dot_dimension_numbers<[1], [0], [0], [1], [0, 0, 1, 1], [], []>} : vector<16x64xbf16>, vector<64x128xbf16>, vector<16x128xf32> -> vector<16x128xf32>
    %c0_4 = arith.constant 0 : index
    %c0_5 = arith.constant 0 : index
    %6 = vector.load %arg6[%c0_4, %c0_5] : memref<1x128xf32, #tpu.memory_space<vmem>>, vector<1x128xf32>
    %7 = vector.broadcast %6 : vector<1x128xf32> to vector<16x128xf32>
    %8 = arith.addf %5, %7 : vector<16x128xf32>
    %c0_6 = arith.constant 0 : index
    %c0_7 = arith.constant 0 : index
    %9 = vector.load %arg7[%c0_6, %c0_7] : memref<16x128xf32, #tpu.memory_space<vmem>>, vector<16x128xf32>
    tpu.vector_store %arg7[%c0_6, %c0_7], %8 {strides = array<i32>} : memref<16x128xf32, #tpu.memory_space<vmem>>, vector<16x128xf32>,
    return
  }
  func.func @transform_0(%arg0: i32, %arg1: i32) -> (i32, i32) {
    %c0_i32 = arith.constant 0 : i32
    %c0_i32_0 = arith.constant 0 : i32
    return %arg1, %c0_i32 : i32, i32
  }
  func.func @transform_1(%arg0: i32, %arg1: i32) -> (i32, i32) {
    %c0_i32 = arith.constant 0 : i32
    %c0_i32_0 = arith.constant 0 : i32
    return %c0_i32, %arg0 : i32, i32
  }
  func.func @transform_2(%arg0: i32, %arg1: i32) -> (i32, i32) {
    %c0_i32 = arith.constant 0 : i32
    %c0_i32_0 = arith.constant 0 : i32
    return %c0_i32, %arg0 : i32, i32
  }
  func.func @transform_3(%arg0: i32, %arg1: i32) -> (i32, i32) {
    %c0_i32 = arith.constant 0 : i32
    %c0_i32_0 = arith.constant 0 : i32
    return %c0_i32, %arg0 : i32, i32
  }
  func.func @transform_4(%arg0: i32, %arg1: i32) -> (i32, i32) {
    %c0_i32 = arith.constant 0 : i32
    %c0_i32_0 = arith.constant 0 : i32
    return %c0_i32, %arg0 : i32, i32
  }
  func.func @transform_5(%arg0: i32, %arg1: i32) -> (i32, i32) {
    %c0_i32 = arith.constant 0 : i32
    return %arg1, %arg0 : i32, i32
  }
}

</mosaic_0001>

<llo_original>
// kernel: tpu_custom_call.1
$region0: #{tpu_custom_call.1}
  #allocation0 [shape = 'u32[]', space=smem, size = 0x4, offset = 0x4, fixed_abs, tag = 'smem constant byte address 0x4 - core index']
  #allocation1 [shape = 'u32[144,128]{1,0:T(1,128)}', space=vmem, size = 0x12000, scoped, tag = 'internal scratch']
  #allocation2 [shape = 'bf16[64,128]{1,0:T(16,128)(2,1)}', space=vmem, size = 0x4000, scoped, tag = 'scratch operand']
  %s0 = inlined_call_operand.hbm [shape: bf16[16,64], index: 0, kind: input, shape index: {}]
  %s1 = inlined_call_operand.hbm [shape: s32[8,128], index: 1, kind: input, shape index: {}]
  %s2 = inlined_call_operand.vmem [shape: s32[2,128], index: 2, kind: input, shape index: {}]
  %s3 = inlined_call_operand.vmem [shape: f32[2,128], index: 3, kind: input, shape index: {}]
  %s4 = inlined_call_operand.vmem [shape: f32[1,128], index: 4, kind: input, shape index: {}]
  %s5 = inlined_call_operand.hbm [shape: f32[16,128], index: 5, kind: output, shape index: {}]
  %s6 = sld [smem:[#allocation0]]
  $region42: #{tpu_custom_call.1} parent=0
    _
  %s8 = ssub.s32 1, %s6
  %s9 = scalar_select 0, %s8, %s6
  $region1: #{tpu_custom_call.1} parent=0
    #allocation3 [shape = 'u8[4096]{0}', space=vmem, size = 0x1000, scoped, tag = 'input window, operand 0, single buffered']
    #allocation4 [shape = 's32[1]{0}', space=sflag, size = 0x4, scoped, tag = 'scoped memory for tpu_custom_call.1']
    #allocation5 [shape = 's32[1]{0}', space=sflag, size = 0x4, scoped, tag = 'scoped memory for tpu_custom_call.1']
    #allocation6 [shape = 'u8[4096]{0}', space=vmem, size = 0x1000, scoped, tag = 'input window, operand 1, single buffered']
    #allocation7 [shape = 's32[1]{0}', space=sflag, size = 0x4, scoped, tag = 'scoped memory for tpu_custom_call.1']
    #allocation8 [shape = 'u8[8192]{0}', space=vmem, size = 0x2000, scoped, tag = 'output window, operand 0, single buffered']
    %10 = vsyncpa [#allocation4], 0
    %11 = vsyncpa [#allocation7], 0
    %12 = vsyncpa [#allocation5], 0
    // Predicated region
    $region2: #{tpu_custom_call.1} parent=1 // pred_check
      _
    $region3: #{tpu_custom_call.1} parent=1 // pred_check_branch
      %14 = sbr.rel (0) target = $region5
    $region4: #{tpu_custom_call.1} parent=1 // pred_region
      %s16 = ssub.s32 128, 128
      %17 = vsyncadd [#allocation4], %s16
      %s18 = sshll.u32 [#allocation3], 4
      %s19 = int_to_ptr.vmem [resolvable:$true] %s18
      %24 = dma.hbm_to_vmem [thread:$0]  %s0, 128, %s19, [#allocation4], 64, 64, 4
    $region5: #{tpu_custom_call.1} parent=1 // pred_fallthru
      _
    // Predicated region
    $region6: #{tpu_custom_call.1} parent=1 // pred_check
      _
    $region7: #{tpu_custom_call.1} parent=1 // pred_check_branch
      %26 = sbr.rel (0) target = $region9
    $region8: #{tpu_custom_call.1} parent=1 // pred_region
      %s28 = ssub.s32 128, 128
      %29 = vsyncadd [#allocation7], %s28
      %s31 = sshll.u32 [#allocation6], 4
      %s32 = int_to_ptr.vmem [resolvable:$true] %s31
      %34 = dma.hbm_to_vmem [thread:$0]  %s1, 128, %s32, [#allocation7]
    $region9: #{tpu_custom_call.1} parent=1 // pred_fallthru
      _
    // Predicated region
    $region10: #{tpu_custom_call.1} parent=1 // pred_check
      _
    $region11: #{tpu_custom_call.1} parent=1 // pred_check_branch
      %36 = sbr.rel (0) target = $region13
    $region12: #{tpu_custom_call.1} parent=1 // pred_region
      _
    $region13: #{tpu_custom_call.1} parent=1 // pred_fallthru
      _
    // Predicated region
    $region14: #{tpu_custom_call.1} parent=1 // pred_check
      _
    $region15: #{tpu_custom_call.1} parent=1 // pred_check_branch
      %38 = sbr.rel (0) target = $region17
    $region16: #{tpu_custom_call.1} parent=1 // pred_region
      _
    $region17: #{tpu_custom_call.1} parent=1 // pred_fallthru
      _
    // Predicated region
    $region18: #{tpu_custom_call.1} parent=1 // pred_check
      _
    $region19: #{tpu_custom_call.1} parent=1 // pred_check_branch
      %40 = sbr.rel (0) target = $region21
    $region20: #{tpu_custom_call.1} parent=1 // pred_region
      _
    $region21: #{tpu_custom_call.1} parent=1 // pred_fallthru
      _
    // Predicated region
    $region22: #{tpu_custom_call.1} parent=1 // pred_check
      _
    $region23: #{tpu_custom_call.1} parent=1 // pred_check_branch
      %42 = sbr.rel (0) target = $region25
    $region24: #{tpu_custom_call.1} parent=1 // pred_region
      %43 = dma.done [#allocation4], 128
    $region25: #{tpu_custom_call.1} parent=1 // pred_fallthru
      _
    // Predicated region
    $region26: #{tpu_custom_call.1} parent=1 // pred_check
      _
    $region27: #{tpu_custom_call.1} parent=1 // pred_check_branch
      %45 = sbr.rel (0) target = $region29
    $region28: #{tpu_custom_call.1} parent=1 // pred_region
      %46 = dma.done [#allocation7], 128
    $region29: #{tpu_custom_call.1} parent=1 // pred_fallthru
      _
    %p48 = scmp.eq.s32.totalorder 0, 0
    // Predicated region
    $region30: #{tpu_custom_call.1} parent=1 // pred_check
      %p49 = pneg %p48
    $region31: #{tpu_custom_call.1} parent=1 // pred_check_branch
      %51 = sbr.rel (%p49) target = $region33
    $region32: #{tpu_custom_call.1} parent=1 // pred_region
      %v52 = vld [vmem:[#allocation6] sm:$0xf]
      %v53 = vld [vmem:[%s2] sm:$0x1]
      %v54 = vld [vmem:[%s3] sm:$0x1]
      %v55 = vand.u32 %v52, 15
      %v56 = vlaneseq
      %v57 = vshrl.u32 %v56, 7
      %v58 = vsub.s32 0, %v57
      %v59 = vrot.slane %v53, %v58
      %v60 = vsub.s32 %v55, %v59
      %v61 = vcvt.s32.f32 %v60
      %v62 = vlaneseq
      %v63 = vshrl.u32 %v62, 7
      %v64 = vsub.s32 0, %v63
      %v65 = vrot.slane %v54, %v64
      %v66 = vmul.f32 %v61, %v65
      %v67 = vpack.c.bf16 %v66, %v66
      %68 = vst [vmem:[#allocation2] sm:$0x3] %v67
      %v69 = vshra.s32 %v52, 4
      %v70 = vand.u32 %v69, 15
      %v71 = vsub.s32 %v70, %v59
      %v72 = vcvt.s32.f32 %v71
      %v73 = vmul.f32 %v72, %v65
      %v74 = vpack.c.bf16 %v73, %v73
      %v76 = vrot.slane %v74, 6
      %78 = vst [vmem:[#allocation2] sm:$0xc] %v76
      %v79 = vshra.s32 %v52, 8
      %v80 = vand.u32 %v79, 15
      %v81 = vsub.s32 %v80, %v59
      %v82 = vcvt.s32.f32 %v81
      %v83 = vmul.f32 %v82, %v65
      %v84 = vpack.c.bf16 %v83, %v83
      %v86 = vrot.slane %v84, 4
      %88 = vst [vmem:[#allocation2] sm:$0x30] %v86
      %v89 = vshra.s32 %v52, 12
      %v90 = vand.u32 %v89, 15
      %v91 = vsub.s32 %v90, %v59
      %v92 = vcvt.s32.f32 %v91
      %v93 = vmul.f32 %v92, %v65
      %v94 = vpack.c.bf16 %v93, %v93
      %v96 = vrot.slane %v94, 2
      %98 = vst [vmem:[#allocation2] sm:$0xc0] %v96
      %v99 = vshra.s32 %v52, 16
      %v100 = vand.u32 %v99, 15
      %v101 = vsub.s32 %v100, %v59
      %v102 = vcvt.s32.f32 %v101
      %v103 = vmul.f32 %v102, %v65
      %v104 = vpack.c.bf16 %v103, %v103
      %105 = vst [vmem:[#allocation2 + $0x8] sm:$0x3] %v104
      %v106 = vshra.s32 %v52, 20
      %v107 = vand.u32 %v106, 15
      %v108 = vsub.s32 %v107, %v59
      %v109 = vcvt.s32.f32 %v108
      %v110 = vmul.f32 %v109, %v65
      %v111 = vpack.c.bf16 %v110, %v110
      %v113 = vrot.slane %v111, 6
      %115 = vst [vmem:[#allocation2 + $0x8] sm:$0xc] %v113
      %v116 = vshra.s32 %v52, 24
      %v117 = vand.u32 %v116, 15
      %v118 = vsub.s32 %v117, %v59
      %v119 = vcvt.s32.f32 %v118
      %v120 = vmul.f32 %v119, %v65
      %v121 = vpack.c.bf16 %v120, %v120
      %v123 = vrot.slane %v121, 4
      %125 = vst [vmem:[#allocation2 + $0x8] sm:$0x30] %v123
      %v126 = vshra.s32 %v52, 28
      %v127 = vand.u32 %v126, 15
      %v128 = vsub.s32 %v127, %v59
      %v129 = vcvt.s32.f32 %v128
      %v130 = vmul.f32 %v129, %v65
      %v131 = vpack.c.bf16 %v130, %v130
      %v133 = vrot.slane %v131, 2
      %135 = vst [vmem:[#allocation2 + $0x8] sm:$0xc0] %v133
      %v136 = vld [vmem:[#allocation6 + $0x4] sm:$0xf]
      %v137 = vld [vmem:[%s2 + $0x1] sm:$0x1]
      %v138 = vld [vmem:[%s3 + $0x1] sm:$0x1]
      %v139 = vand.u32 %v136, 15
      %v140 = vlaneseq
      %v141 = vshrl.u32 %v140, 7
      %v142 = vsub.s32 0, %v141
      %v143 = vrot.slane %v137, %v142
      %v144 = vsub.s32 %v139, %v143
      %v145 = vcvt.s32.f32 %v144
      %v146 = vlaneseq
      %v147 = vshrl.u32 %v146, 7
      %v148 = vsub.s32 0, %v147
      %v149 = vrot.slane %v138, %v148
      %v150 = vmul.f32 %v145, %v149
      %v151 = vpack.c.bf16 %v150, %v150
      %152 = vst [vmem:[#allocation2 + $0x10] sm:$0x3] %v151
      %v153 = vshra.s32 %v136, 4
      %v154 = vand.u32 %v153, 15
      %v155 = vsub.s32 %v154, %v143
      %v156 = vcvt.s32.f32 %v155
      %v157 = vmul.f32 %v156, %v149
      %v158 = vpack.c.bf16 %v157, %v157
      %v160 = vrot.slane %v158, 6
      %162 = vst [vmem:[#allocation2 + $0x10] sm:$0xc] %v160
      %v163 = vshra.s32 %v136, 8
      %v164 = vand.u32 %v163, 15
      %v165 = vsub.s32 %v164, %v143
      %v166 = vcvt.s32.f32 %v165
      %v167 = vmul.f32 %v166, %v149
      %v168 = vpack.c.bf16 %v167, %v167
      %v170 = vrot.slane %v168, 4
      %172 = vst [vmem:[#allocation2 + $0x10] sm:$0x30] %v170
      %v173 = vshra.s32 %v136, 12
      %v174 = vand.u32 %v173, 15
      %v175 = vsub.s32 %v174, %v143
      %v176 = vcvt.s32.f32 %v175
      %v177 = vmul.f32 %v176, %v149
      %v178 = vpack.c.bf16 %v177, %v177
      %v180 = vrot.slane %v178, 2
      %182 = vst [vmem:[#allocation2 + $0x10] sm:$0xc0] %v180
      %v183 = vshra.s32 %v136, 16
      %v184 = vand.u32 %v183, 15
      %v185 = vsub.s32 %v184, %v143
      %v186 = vcvt.s32.f32 %v185
      %v187 = vmul.f32 %v186, %v149
      %v188 = vpack.c.bf16 %v187, %v187
      %189 = vst [vmem:[#allocation2 + $0x18] sm:$0x3] %v188
      %v190 = vshra.s32 %v136, 20
      %v191 = vand.u32 %v190, 15
      %v192 = vsub.s32 %v191, %v143
      %v193 = vcvt.s32.f32 %v192
      %v194 = vmul.f32 %v193, %v149
      %v195 = vpack.c.bf16 %v194, %v194
      %v197 = vrot.slane %v195, 6
      %199 = vst [vmem:[#allocation2 + $0x18] sm:$0xc] %v197
      %v200 = vshra.s32 %v136, 24
      %v201 = vand.u32 %v200, 15
      %v202 = vsub.s32 %v201, %v143
      %v203 = vcvt.s32.f32 %v202
      %v204 = vmul.f32 %v203, %v149
      %v205 = vpack.c.bf16 %v204, %v204
      %v207 = vrot.slane %v205, 4
      %209 = vst [vmem:[#allocation2 + $0x18] sm:$0x30] %v207
      %v210 = vshra.s32 %v136, 28
      %v211 = vand.u32 %v210, 15
      %v212 = vsub.s32 %v211, %v143
      %v213 = vcvt.s32.f32 %v212
      %v214 = vmul.f32 %v213, %v149
      %v215 = vpack.c.bf16 %v214, %v214
      %v217 = vrot.slane %v215, 2
      %219 = vst [vmem:[#allocation2 + $0x18] sm:$0xc0] %v217
    $region33: #{tpu_custom_call.1} parent=1 // pred_fallthru
      _
    %v220 = vld [vmem:[#allocation3] sm:$0xf]
    %v221 = vld [vmem:[#allocation3 + $0x4] sm:$0xf]
    %v222 = vld [vmem:[#allocation2] sm:$0xff]
    %v223 = vld [vmem:[#allocation2 + $0x8] sm:$0xff]
    %v224 = vld [vmem:[#allocation2 + $0x10] sm:$0xff]
    %v225 = vld [vmem:[#allocation2 + $0x18] sm:$0xff]
    %v226 = vld [vmem:[%s4] sm:$0x1]
    %v228 = vlaneseq
    %v229 = vshrl.u32 %v228, 7
    %v230 = vsub.s32 0, %v229
    %v231 = vrot.slane %v226, %v230
    %v235 = vunpack.c.l.b16 %v220
    %v236 = vunpack.c.l.b16 %v221
    %v237 = vpack.c.b16 %v236, %v235
    %vm238 = vcmask 523264
    %v240 = vsel %vm238, %v237, 0
    %242 = vmatprep.subr.bf16.mxu0 0
    %243 = vmatpush1.bf16.msra.mxu0 %v222
    %244 = vmatprep.subr.bf16.mxu0 0
    %245 = vmatpush1.bf16.msra.mxu0 %v223
    %246 = vmatprep.subr.bf16.mxu0 0
    %247 = vmatpush1.bf16.msra.mxu0 %v224
    %248 = vmatprep.subr.bf16.mxu0 0
    %249 = vmatpush1.bf16.msra.mxu0 %v225
    %250 = vmatprep.subr.bf16.mxu0 0
    %251 = vmatpush1.bf16.msra.mxu0 0
    %252 = vmatprep.subr.bf16.mxu0 0
    %253 = vmatpush1.bf16.msra.mxu0 0
    %254 = vmatprep.subr.bf16.mxu0 0
    %255 = vmatpush1.bf16.msra.mxu0 0
    %256 = vmatprep.subr.bf16.mxu0 0
    %257 = vmatpush1.bf16.msra.mxu0 0
    %258 = vmatprep.subr.bf16.mxu0 0
    %259 = vmatpush1.bf16.msra.mxu0 0
    %260 = vmatprep.subr.bf16.mxu0 0
    %261 = vmatpush1.bf16.msra.mxu0 0
    %262 = vmatprep.subr.bf16.mxu0 0
    %263 = vmatpush1.bf16.msra.mxu0 0
    %264 = vmatprep.subr.bf16.mxu0 0
    %265 = vmatpush1.bf16.msra.mxu0 0
    %266 = vmatprep.subr.bf16.mxu0 0
    %267 = vmatpush1.bf16.msra.mxu0 0
    %268 = vmatprep.subr.bf16.mxu0 0
    %269 = vmatpush1.bf16.msra.mxu0 0
    %270 = vmatprep.subr.bf16.mxu0 0
    %271 = vmatpush1.bf16.msra.mxu0 0
    %272 = vmatprep.subr.bf16.mxu0 0
    %273 = vmatpush1.bf16.msra.mxu0 0
    %274 = vmatprep.mubr.bf16.mxu0 0
    %275 = vmatmul.mubr.bf16.gmra.mrb[0].mxu0 %v240
    %v276 = vpop.f32.mrb[0].mxu0
    %v277 = vadd.f32 %v231, %v276
    %v278 = vpop.f32.mrb[0].mxu0
    %v279 = vpop.f32.mrb[0].mxu0
    %v280 = vadd.f32 %v231, %v279
    %v281 = vpop.f32.mrb[0].mxu0
    %282 = vdwg.mxu0
    %283 = vst [vmem:[#allocation8] sm:$0xff] %v277
    %284 = vst [vmem:[#allocation8 + $0x8] sm:$0xff] %v280
    // Predicated region
    $region34: #{tpu_custom_call.1} parent=1 // pred_check
      _
    $region35: #{tpu_custom_call.1} parent=1 // pred_check_branch
      %286 = sbr.rel (0) target = $region37
    $region36: #{tpu_custom_call.1} parent=1 // pred_region
      %s288 = ssub.s32 256, 256
      %289 = vsyncadd [#allocation5], %s288
      %s290 = sshll.u32 [#allocation8], 4
      %s291 = int_to_ptr.vmem [resolvable:$true] %s290
      %296 = dma.vmem_to_hbm [thread:$0]  %s291, 256, %s5, [#allocation5], 128, 128, 8
    $region37: #{tpu_custom_call.1} parent=1 // pred_fallthru
      _
    // Predicated region
    $region38: #{tpu_custom_call.1} parent=1 // pred_check
      _
    $region39: #{tpu_custom_call.1} parent=1 // pred_check_branch
      %298 = sbr.rel (0) target = $region41
    $region40: #{tpu_custom_call.1} parent=1 // pred_region
      %299 = dma.done [#allocation5], 256
    $region41: #{tpu_custom_call.1} parent=1 // pred_fallthru
      _
    %300 = vsyncpa [#allocation4], 1
    %301 = vsyncpa [#allocation7], 1
    %302 = vsyncpa [#allocation5], 1

</llo_original>
